<compile_context>
chip_gen: v7x
topology: tpu7x:2x2x1
jax: 0.10.0
libtpu: 0.0.40
codegen_flags: <defaults>
</compile_context>

<pallas_src>
import math
from functools import partial

import jax
import jax.numpy as jnp
from jax import lax
from jax.experimental import pallas as pl
from jax.experimental.pallas import tpu as pltpu


# ----------------------------------------------------------------------------
# Hardware-aware knobs
# ----------------------------------------------------------------------------
def _default_vmem_limit():
    """Generation-aware VMEM budget: ~78% of physical VMEM.
    (~100 MiB on v5e/v6e with 128 MiB, ~50 MiB on v7x with 64 MiB)."""
    try:
        info = pltpu.get_tpu_info()
        cap = None
        for attr in ("vmem_capacity_bytes", "vmem_bytes", "vmem_size_bytes"):
            cap = getattr(info, attr, None)
            if cap:
                break
        if cap:
            return int(cap * 0.78)
    except Exception:
        pass
    return 48 * 1024 * 1024  # conservative fallback (fits v7x)


def _resident_spec(block_shape, index_map):
    """BlockSpec for constant-index (resident) blocks: single-buffered so they
    don't consume 2x VMEM (matters on v7x's 64 MiB).  Falls back to a plain
    BlockSpec on jax versions without pipeline_mode/Buffered."""
    try:
        return pl.BlockSpec(block_shape, index_map, pipeline_mode=pl.Buffered(1))
    except Exception:
        return pl.BlockSpec(block_shape, index_map)


# ----------------------------------------------------------------------------
# Kernel 1: fused Q/K/V projection, tiled over rows.
#   x tile read once; wq/wk/wv/biases are resident (constant block index).
#   Inputs arrive pre-cast to compute_dtype (bf16 in production); f32 accum.
# ----------------------------------------------------------------------------
def _qkv_kernel(x_ref, wq_ref, wk_ref, wv_ref, bq_ref, bk_ref, bv_ref,
                q_ref, k_ref, v_ref):
    x = x_ref[...]                                            # (tm, K) compute dtype
    for w_ref, b_ref, o_ref in ((wq_ref, bq_ref, q_ref),
                                (wk_ref, bk_ref, k_ref),
                                (wv_ref, bv_ref, v_ref)):
        y = jnp.dot(x, w_ref[...], preferred_element_type=jnp.float32)
        o_ref[...] = (y + b_ref[...]).astype(o_ref.dtype)     # bias kept f32


def qkv_projection(x2d, wq, bq, wk, bk, wv, bv,
                   *, out_dtype, block_m, vmem_limit):
    """x2d: (M, K) compute dtype; w*: (K, N) compute dtype; b*: (N,) f32."""
    M, K = x2d.shape
    N = wq.shape[1]
    tm = min(block_m, M)
    if tm != M and tm % 8 != 0:     # respect (8,128) block rule on the row dim
        tm = M
    grid = (pl.cdiv(M, tm),)

    x_spec = pl.BlockSpec((tm, K), lambda i: (i, 0))
    w_spec = _resident_spec((K, N), lambda i: (0, 0))   # resident, single-buffered
    b_spec = _resident_spec((1, N), lambda i: (0, 0))
    o_spec = pl.BlockSpec((tm, N), lambda i: (i, 0))

    q, k, v = pl.pallas_call(
        _qkv_kernel,
        out_shape=tuple(jax.ShapeDtypeStruct((M, N), out_dtype) for _ in range(3)),
        grid=grid,
        in_specs=[x_spec, w_spec, w_spec, w_spec, b_spec, b_spec, b_spec],
        out_specs=(o_spec, o_spec, o_spec),
        compiler_params=pltpu.CompilerParams(
            dimension_semantics=("parallel",),
            vmem_limit_bytes=vmem_limit),
    )(x2d, wq, wk, wv,
      bq.reshape(1, N), bk.reshape(1, N), bv.reshape(1, N))
    return q, k, v


# ----------------------------------------------------------------------------
# Kernel 2: per-batch attention over all heads, lane-dense (S, H) ctx output.
# ----------------------------------------------------------------------------
def _make_attn_kernel(*, nh, head_dim, has_mask, has_head_mask, return_probs,
                      mask_heads, compute_dtype, approx_recip):
    def kernel(*refs):
        it = iter(refs)
        q_ref = next(it)
        k_ref = next(it)
        v_ref = next(it)
        mask_ref = next(it) if has_mask else None
        hm_ref = next(it) if has_head_mask else None   # (1, nh) f32 in SMEM
        ctx_ref = next(it)
        probs_ref = next(it) if return_probs else None

        for h in range(nh):                  # static unroll over heads
            lo = h * head_dim
            hi = lo + head_dim
            qh = q_ref[0, :, lo:hi]          # (S, d) — q pre-scaled by 1/sqrt(d)
            kh = k_ref[0, :, lo:hi]
            vh = v_ref[0, :, lo:hi]

            # q @ k^T via transposed-RHS contraction (no in-kernel transpose).
            scores = lax.dot_general(qh, kh, (((1,), (1,)), ((), ())),
                                     preferred_element_type=jnp.float32)  # (S,S)
            if mask_ref is not None:
                mh = mask_ref[0, h if mask_heads > 1 else 0]   # (Mq, S), bcast
                scores = scores + mh

            m = jnp.max(scores, axis=-1, keepdims=True)
            e = jnp.exp(scores - m)                             # f32 softmax math
            denom = jnp.sum(e, axis=-1, keepdims=True)
            inv = (pl.reciprocal(denom, approx=True) if approx_recip
                   else 1.0 / denom)

            # TODO(synk): attention-probs dropout is identity in eval mode; a
            # training path would draw pltpu.prng_random_bits here.
            if return_probs:
                p = e * inv
                if hm_ref is not None:
                    p = p * hm_ref[0, h]
                probs_ref[0, h] = p.astype(probs_ref.dtype)
                ctx_h = jnp.dot(p.astype(compute_dtype), vh,
                                preferred_element_type=jnp.float32)
            else:
                # Deferred normalization: inv applied on the (S,d) tile.
                ctx_h = jnp.dot(e.astype(compute_dtype), vh,
                                preferred_element_type=jnp.float32) * inv
                if hm_ref is not None:
                    ctx_h = ctx_h * hm_ref[0, h]

            # Per-head slab write straight into the lane-dense (S, H) block.
            ctx_ref[0, :, lo:hi] = ctx_h.astype(ctx_ref.dtype)

    return kernel


def attention(q, k, v, mask4, head_mask_vec, *, num_heads, head_dim,
              return_probs, compute_dtype, approx_recip, vmem_limit):
    """q,k,v: (B,S,H); mask4: None or (B,{1,nh},{1,S},S) additive;
    head_mask_vec: None or (1, nh) f32.  Returns (ctx (B,S,H), probs or None)."""
    B, S, H = q.shape
    has_mask = mask4 is not None
    has_hm = head_mask_vec is not None
    mask_heads = mask4.shape[1] if has_mask else 1

    qkv_spec = pl.BlockSpec((1, S, H), lambda b: (b, 0, 0))
    in_specs = [qkv_spec, qkv_spec, qkv_spec]
    args = [q, k, v]
    if has_mask:
        Hm, Mq = mask4.shape[1], mask4.shape[2]
        in_specs.append(pl.BlockSpec((1, Hm, Mq, S), lambda b: (b, 0, 0, 0)))
        args.append(mask4)
    if has_hm:
        in_specs.append(pl.BlockSpec(memory_space=pltpu.MemorySpace.SMEM))
        args.append(head_mask_vec)

    ctx_spec = pl.BlockSpec((1, S, H), lambda b: (b, 0, 0))
    kernel = _make_attn_kernel(
        nh=num_heads, head_dim=head_dim, has_mask=has_mask, has_head_mask=has_hm,
        return_probs=return_probs, mask_heads=mask_heads,
        compute_dtype=compute_dtype, approx_recip=approx_recip)
    cp = pltpu.CompilerParams(dimension_semantics=("parallel",),
                              vmem_limit_bytes=vmem_limit)

    if return_probs:
        ctx, probs = pl.pallas_call(
            kernel,
            out_shape=(jax.ShapeDtypeStruct((B, S, H), compute_dtype),
                       jax.ShapeDtypeStruct((B, num_heads, S, S), jnp.float32)),
            grid=(B,),
            in_specs=in_specs,
            out_specs=(ctx_spec,
                       pl.BlockSpec((1, num_heads, S, S),
                                    lambda b: (b, 0, 0, 0))),
            compiler_params=cp,
        )(*args)
        return ctx, probs

    ctx = pl.pallas_call(
        kernel,
        out_shape=jax.ShapeDtypeStruct((B, S, H), compute_dtype),
        grid=(B,),
        in_specs=in_specs,
        out_specs=ctx_spec,
        compiler_params=cp,
    )(*args)
    return ctx, None


# ----------------------------------------------------------------------------
# Kernel 3: BertFusion  softmax(ctx @ vis^T) @ vis, tiled over query rows.
# ----------------------------------------------------------------------------
def _fusion_kernel(ctx_ref, vis_ref, out_ref, *, approx_recip):
    ctx = ctx_ref[0]                              # (ts, H)  compute dtype
    vis = vis_ref[0]                              # (Sv, H)  compute dtype, resident
    scores = lax.dot_general(ctx, vis, (((1,), (1,)), ((), ())),
                             preferred_element_type=jnp.float32)  # (ts, Sv)
    m = jnp.max(scores, axis=-1, keepdims=True)
    e = jnp.exp(scores - m)
    denom = jnp.sum(e, axis=-1, keepdims=True)
    inv = pl.reciprocal(denom, approx=True) if approx_recip else 1.0 / denom
    p = (e * inv).astype(vis.dtype)
    out_ref[0] = jnp.dot(p, vis,
                         preferred_element_type=jnp.float32).astype(out_ref.dtype)


def fusion(context_layer, visual_hidden_state,
           *, compute_dtype, block_s, vmem_limit, approx_recip):
    """context_layer: (B,S,H), visual_hidden_state: (B,Sv,H) -> (B,S,H)."""
    B, S, H = context_layer.shape
    Sv = visual_hidden_state.shape[1]
    ctx = context_layer.astype(compute_dtype)
    vis = visual_hidden_state.astype(compute_dtype)   # cast once in HBM
    ts = min(block_s, S)
    if ts != S and ts % 8 != 0:
        ts = S
    grid = (B, pl.cdiv(S, ts))
    return pl.pallas_call(
        partial(_fusion_kernel, approx_recip=approx_recip),
        out_shape=jax.ShapeDtypeStruct((B, S, H), compute_dtype),
        grid=grid,
        in_specs=[pl.BlockSpec((1, ts, H), lambda b, s: (b, s, 0)),
                  pl.BlockSpec((1, Sv, H), lambda b, s: (b, 0, 0))],  # resident per b
        out_specs=pl.BlockSpec((1, ts, H), lambda b, s: (b, s, 0)),
        compiler_params=pltpu.CompilerParams(
            dimension_semantics=("parallel", "parallel"),
            vmem_limit_bytes=vmem_limit),
    )(ctx, vis)


# ----------------------------------------------------------------------------
# Mask canonicalization (no S× blow-up for key-only masks)
# ----------------------------------------------------------------------------
def _canonicalize_mask(attention_mask, B, nh, S):
    """Additive mask -> (B, Hm, Mq, S) with Hm in {1, nh}, Mq in {1, S}."""
    if attention_mask is None:
        return None
    m = jnp.asarray(attention_mask, jnp.float32)
    while m.ndim < 4:
        m = m[None]          # assume missing leading (batch/head/query) dims
    _, h_, q_, _ = m.shape
    tgt = (B, 1 if h_ == 1 else nh, 1 if q_ == 1 else S, S)
    return jnp.broadcast_to(m, tgt)


# ----------------------------------------------------------------------------
# Module wrapper
# ----------------------------------------------------------------------------
class BertSelfAttentionPallas:
    def __init__(self, hidden_size, num_attention_heads, key,
                 compute_dtype=jnp.float32, approx_softmax_recip=False):
        assert hidden_size % num_attention_heads == 0
        self.num_attention_heads = num_attention_heads
        self.attention_head_size = hidden_size // num_attention_heads
        self.all_head_size = hidden_size
        # Production BERT sizes: compute_dtype=jnp.bfloat16 (MXU-native on all
        # generations, halves HBM traffic of the mem-bound QKV projection).
        # f32 accumulation + f32 softmax are preserved inside the kernels.
        self.compute_dtype = compute_dtype
        self.approx_recip = approx_softmax_recip
        self.vmem_limit = _default_vmem_limit()
        # Larger row tiles on 128 MiB parts (v5e/v6e), conservative on v7x.
        big = self.vmem_limit >= 80 * 1024 * 1024
        self.block_m = 512 if big else 256
        self.block_s = 512 if big else 256

        # Deterministic parameter init (PyTorch nn.Linear-style uniform bounds).
        bound = 1.0 / math.sqrt(hidden_size)
        ks = jax.random.split(key, 6)
        shape_w = (hidden_size, self.all_head_size)  # stored as (in, out) = W^T
        self.wq = jax.random.uniform(ks[0], shape_w, jnp.float32, -bound, bound)
        self.bq = jax.random.uniform(ks[1], (self.all_head_size,), jnp.float32, -bound, bound)
        self.wk = jax.random.uniform(ks[2], shape_w, jnp.float32, -bound, bound)
        self.bk = jax.random.uniform(ks[3], (self.all_head_size,), jnp.float32, -bound, bound)
        self.wv = jax.random.uniform(ks[4], shape_w, jnp.float32, -bound, bound)
        self.bv = jax.random.uniform(ks[5], (self.all_head_size,), jnp.float32, -bound, bound)

        # Kernel-ready params: 1/sqrt(d) folded into the query projection,
        # weights pre-cast to compute_dtype in HBM, biases kept f32.
        scale = 1.0 / math.sqrt(self.attention_head_size)
        self._wq_dev = (self.wq * scale).astype(compute_dtype)
        self._bq_dev = self.bq * scale
        self._wk_dev = self.wk.astype(compute_dtype)
        self._bk_dev = self.bk
        self._wv_dev = self.wv.astype(compute_dtype)
        self._bv_dev = self.bv

    def _transpose_for_scores(self, x):
        B, S, _ = x.shape
        x = x.reshape(B, S, self.num_attention_heads, self.attention_head_size)
        return jnp.transpose(x, (0, 2, 1, 3))  # (B, nh, S, d)

    def __call__(self, hidden_states, attention_mask=None, head_mask=None,
                 output_attentions=False, visual_hidden_state=None,
                 output_qks=None):
        B, S, H = hidden_states.shape
        nh = self.num_attention_heads
        cd = self.compute_dtype
        x2d = hidden_states.reshape(B * S, H).astype(cd)   # single HBM cast

        # Fused Q/K/V projection: one kernel, x read once, weights resident.
        # NOTE: q comes out pre-scaled by 1/sqrt(head_dim) (folded at init).
        q, k, v = qkv_projection(x2d, self._wq_dev, self._bq_dev,
                                 self._wk_dev, self._bk_dev,
                                 self._wv_dev, self._bv_dev,
                                 out_dtype=cd, block_m=self.block_m,
                                 vmem_limit=self.vmem_limit)
        q = q.reshape(B, S, H)
        k = k.reshape(B, S, H)
        v = v.reshape(B, S, H)

        # (B, nh, S, d) layout only materialized when actually requested.
        qks = (self._transpose_for_scores(k),
               self._transpose_for_scores(v)) if output_qks else None

        # No (B,S,S) mask materialization: keep key-only masks (B,1,1,S).
        mask4 = _canonicalize_mask(attention_mask, B, nh, S)

        # head_mask: common per-head-scalar case handled in-kernel via SMEM.
        hm_vec = None
        headmask_fallback = None
        if head_mask is not None:
            hm = jnp.asarray(head_mask, jnp.float32)
            if hm.size in (1, nh):
                hm_vec = jnp.broadcast_to(hm.reshape(-1), (nh,)).reshape(1, nh)
            else:
                headmask_fallback = hm   # rare: richer-than-per-head mask

        need_probs = bool(output_attentions) or (headmask_fallback is not None)
        context_layer, attention_probs = attention(
            q, k, v, mask4, hm_vec,
            num_heads=nh,
            head_dim=self.attention_head_size,
            return_probs=need_probs,
            compute_dtype=cd,
            approx_recip=self.approx_recip and not need_probs,
            vmem_limit=self.vmem_limit)

        if headmask_fallback is not None:
            # TODO(synk): rare path — head_mask richer than (num_heads,);
            # applied on the returned probs in plain JAX.
            attention_probs = attention_probs * jnp.broadcast_to(
                headmask_fallback, (B, nh, S, S))
            value_layer = self._transpose_for_scores(v)
            ctx4 = jnp.einsum("bhqk,bhkd->bhqd",
                              attention_probs.astype(value_layer.dtype),
                              value_layer)
            context_layer = jnp.transpose(ctx4, (0, 2, 1, 3)).reshape(B, S, H)
            context_layer = context_layer.astype(cd)

        fusion_output = (
            fusion(context_layer, visual_hidden_state,
                   compute_dtype=cd, block_s=self.block_s,
                   vmem_limit=self.vmem_limit,
                   approx_recip=self.approx_recip)
            if visual_hidden_state is not None else None
        )

        outputs = ((context_layer, attention_probs)
                   if output_attentions else (context_layer,))
        return (outputs, fusion_output, qks)


# ----------------------------------------------------------------------------
# Reference (plain JAX) for verification
# ----------------------------------------------------------------------------
def reference_forward(mod, hidden_states, attention_mask=None,
                      visual_hidden_state=None, head_mask=None):
    B, S, H = hidden_states.shape
    nh, d = mod.num_attention_heads, mod.attention_head_size
    x2d = hidden_states.reshape(B * S, H)
    q = (x2d @ mod.wq + mod.bq).reshape(B, S, nh, d).transpose(0, 2, 1, 3)
    k = (x2d @ mod.wk + mod.bk).reshape(B, S, nh, d).transpose(0, 2, 1, 3)
    v = (x2d @ mod.wv + mod.bv).reshape(B, S, nh, d).transpose(0, 2, 1, 3)
    scores = jnp.einsum("bhqd,bhkd->bhqk", q, k) / math.sqrt(d)
    if attention_mask is not None:
        scores = scores + attention_mask
    probs = jax.nn.softmax(scores, axis=-1)
    if head_mask is not None:
        probs = probs * jnp.asarray(head_mask, jnp.float32).reshape(1, nh, 1, 1)
    ctx = jnp.einsum("bhqk,bhkd->bhqd", probs, v)
    ctx = ctx.transpose(0, 2, 1, 3).reshape(B, S, H)
    fout = None
    if visual_hidden_state is not None:
        fscores = jnp.einsum("bsh,bvh->bsv", ctx, visual_hidden_state)
        fprobs = jax.nn.softmax(fscores, axis=-1)
        fout = jnp.einsum("bsv,bvh->bsh", fprobs, visual_hidden_state)
    return ctx, probs, fout


if __name__ == "__main__":
    B, S, Sv, H, NH = 2, 8, 8, 32, 4

    key = jax.random.PRNGKey(0)
    k_param, k_x, k_vis = jax.random.split(key, 3)

    mod = BertSelfAttentionPallas(hidden_size=H, num_attention_heads=NH,
                                  key=k_param, compute_dtype=jnp.float32)

    hidden_states = jax.random.normal(k_x, (B, S, H), jnp.float32)
    visual_hidden_state = jax.random.normal(k_vis, (B, Sv, H), jnp.float32)
    attention_mask = jnp.zeros((B, 1, S, S), jnp.float32)  # additive mask

    # ---- Full path: probs requested, fusion, qks ----------------------------
    outputs, fusion_output, qks = mod(
        hidden_states,
        attention_mask=attention_mask,
        output_attentions=True,
        visual_hidden_state=visual_hidden_state,
        output_qks=True,
    )
    context_layer, attention_probs = outputs
    jax.block_until_ready(context_layer)
    jax.block_until_ready(attention_probs)
    jax.block_until_ready(fusion_output)
    jax.block_until_ready(qks)

    ref_ctx, ref_probs, ref_fout = reference_forward(
        mod, hidden_states, attention_mask, visual_hidden_state)
    assert jnp.allclose(context_layer, ref_ctx, atol=2e-3, rtol=2e-3)
    assert jnp.allclose(attention_probs, ref_probs, atol=2e-3, rtol=2e-3)
    assert jnp.allclose(fusion_output, ref_fout, atol=2e-3, rtol=2e-3)

    # ---- Fast path: no mask, no probs, no fusion -----------------------------
    (ctx_fast,), _, _ = mod(hidden_states)
    jax.block_until_ready(ctx_fast)
    ref_ctx_nm, _, _ = reference_forward(mod, hidden_states, None, None)
    assert jnp.allclose(ctx_fast, ref_ctx_nm, atol=2e-3, rtol=2e-3)

    # ---- head_mask handled in-kernel (per-head scalars via SMEM) -------------
    head_mask = jnp.array([1.0, 0.0, 1.0, 0.5], jnp.float32)
    (ctx_hm, probs_hm), _, _ = mod(hidden_states,
                                   attention_mask=attention_mask,
                                   head_mask=head_mask,
                                   output_attentions=True)
    jax.block_until_ready(ctx_hm)
    ref_ctx_hm, ref_probs_hm, _ = reference_forward(
        mod, hidden_states, attention_mask, None, head_mask=head_mask)
    assert jnp.allclose(ctx_hm, ref_ctx_hm, atol=2e-3, rtol=2e-3)
    assert jnp.allclose(probs_hm, ref_probs_hm, atol=2e-3, rtol=2e-3)

    # ---- bf16 compute-dtype smoke run (production MXU path) ------------------
    mod_bf16 = BertSelfAttentionPallas(hidden_size=H, num_attention_heads=NH,
                                       key=k_param, compute_dtype=jnp.bfloat16)
    (ctx_b,), fout_b, _ = mod_bf16(hidden_states,
                                   attention_mask=attention_mask,
                                   visual_hidden_state=visual_hidden_state)
    jax.block_until_ready(ctx_b)
    jax.block_until_ready(fout_b)
    assert ctx_b.shape == (B, S, H) and fout_b.shape == (B, S, H)
    assert bool(jnp.all(jnp.isfinite(ctx_b.astype(jnp.float32))))
    assert bool(jnp.all(jnp.isfinite(fout_b.astype(jnp.float32))))

    print("KERNEL_OK")
</pallas_src>

<mosaic_0001>
module attributes {stable_mosaic.version = 11 : i64} {
  func.func @_qkv_kernel(%arg0: i32, %arg1: memref<16x32xf32, #tpu.memory_space<vmem>>, %arg2: memref<32x32xf32, #tpu.memory_space<vmem>>, %arg3: memref<32x32xf32, #tpu.memory_space<vmem>>, %arg4: memref<32x32xf32, #tpu.memory_space<vmem>>, %arg5: memref<1x32xf32, #tpu.memory_space<vmem>>, %arg6: memref<1x32xf32, #tpu.memory_space<vmem>>, %arg7: memref<1x32xf32, #tpu.memory_space<vmem>>, %arg8: memref<16x32xf32, #tpu.memory_space<vmem>>, %arg9: memref<16x32xf32, #tpu.memory_space<vmem>>, %arg10: memref<16x32xf32, #tpu.memory_space<vmem>>) attributes {dimension_semantics = [#tpu.dimension_semantics<parallel>], iteration_bounds = array<i64: 1>, scalar_prefetch = 0 : i64, scratch_operands = 0 : i64, tpu.core_type = #tpu.core_type<tc>, window_params = [{transform_indices = @transform_0, window_bounds = array<i64: 16, 32>}, {pipeline_mode = #tpu.pipeline_mode<synchronous>, transform_indices = @transform_1, window_bounds = array<i64: 32, 32>}, {pipeline_mode = #tpu.pipeline_mode<synchronous>, transform_indices = @transform_2, window_bounds = array<i64: 32, 32>}, {pipeline_mode = #tpu.pipeline_mode<synchronous>, transform_indices = @transform_3, window_bounds = array<i64: 32, 32>}, {pipeline_mode = #tpu.pipeline_mode<synchronous>, transform_indices = @transform_4, window_bounds = array<i64: 1, 32>}, {pipeline_mode = #tpu.pipeline_mode<synchronous>, transform_indices = @transform_5, window_bounds = array<i64: 1, 32>}, {pipeline_mode = #tpu.pipeline_mode<synchronous>, transform_indices = @transform_6, window_bounds = array<i64: 1, 32>}, {transform_indices = @transform_7, window_bounds = array<i64: 16, 32>}, {transform_indices = @transform_8, window_bounds = array<i64: 16, 32>}, {transform_indices = @transform_9, window_bounds = array<i64: 16, 32>}]} {
    %c0 = arith.constant 0 : index
    %c0_0 = arith.constant 0 : index
    %0 = vector.load %arg1[%c0, %c0_0] : memref<16x32xf32, #tpu.memory_space<vmem>>, vector<16x32xf32>
    %c0_1 = arith.constant 0 : index
    %c0_2 = arith.constant 0 : index
    %1 = vector.load %arg2[%c0_1, %c0_2] : memref<32x32xf32, #tpu.memory_space<vmem>>, vector<32x32xf32>
    %cst = arith.constant dense<0.000000e+00> : vector<16x32xf32>
    %2 = tpu.matmul %0, %1, %cst {dimension_numbers = #tpu.dot_dimension_numbers<[1], [0], [0], [1], [0, 0, 1, 1], [], []>} : vector<16x32xf32>, vector<32x32xf32>, vector<16x32xf32> -> vector<16x32xf32>
    %c0_3 = arith.constant 0 : index
    %c0_4 = arith.constant 0 : index
    %3 = vector.load %arg5[%c0_3, %c0_4] : memref<1x32xf32, #tpu.memory_space<vmem>>, vector<1x32xf32>
    %4 = vector.broadcast %3 : vector<1x32xf32> to vector<16x32xf32>
    %5 = arith.addf %2, %4 : vector<16x32xf32>
    %c0_5 = arith.constant 0 : index
    %c0_6 = arith.constant 0 : index
    %6 = vector.load %arg8[%c0_5, %c0_6] : memref<16x32xf32, #tpu.memory_space<vmem>>, vector<16x32xf32>
    tpu.vector_store %arg8[%c0_5, %c0_6], %5 {strides = array<i32>} : memref<16x32xf32, #tpu.memory_space<vmem>>, vector<16x32xf32>,
    %c0_7 = arith.constant 0 : index
    %c0_8 = arith.constant 0 : index
    %7 = vector.load %arg3[%c0_7, %c0_8] : memref<32x32xf32, #tpu.memory_space<vmem>>, vector<32x32xf32>
    %cst_9 = arith.constant dense<0.000000e+00> : vector<16x32xf32>
    %8 = tpu.matmul %0, %7, %cst_9 {dimension_numbers = #tpu.dot_dimension_numbers<[1], [0], [0], [1], [0, 0, 1, 1], [], []>} : vector<16x32xf32>, vector<32x32xf32>, vector<16x32xf32> -> vector<16x32xf32>
    %c0_10 = arith.constant 0 : index
    %c0_11 = arith.constant 0 : index
    %9 = vector.load %arg6[%c0_10, %c0_11] : memref<1x32xf32, #tpu.memory_space<vmem>>, vector<1x32xf32>
    %10 = vector.broadcast %9 : vector<1x32xf32> to vector<16x32xf32>
    %11 = arith.addf %8, %10 : vector<16x32xf32>
    %c0_12 = arith.constant 0 : index
    %c0_13 = arith.constant 0 : index
    %12 = vector.load %arg9[%c0_12, %c0_13] : memref<16x32xf32, #tpu.memory_space<vmem>>, vector<16x32xf32>
    tpu.vector_store %arg9[%c0_12, %c0_13], %11 {strides = array<i32>} : memref<16x32xf32, #tpu.memory_space<vmem>>, vector<16x32xf32>,
    %c0_14 = arith.constant 0 : index
    %c0_15 = arith.constant 0 : index
    %13 = vector.load %arg4[%c0_14, %c0_15] : memref<32x32xf32, #tpu.memory_space<vmem>>, vector<32x32xf32>
    %cst_16 = arith.constant dense<0.000000e+00> : vector<16x32xf32>
    %14 = tpu.matmul %0, %13, %cst_16 {dimension_numbers = #tpu.dot_dimension_numbers<[1], [0], [0], [1], [0, 0, 1, 1], [], []>} : vector<16x32xf32>, vector<32x32xf32>, vector<16x32xf32> -> vector<16x32xf32>
    %c0_17 = arith.constant 0 : index
    %c0_18 = arith.constant 0 : index
    %15 = vector.load %arg7[%c0_17, %c0_18] : memref<1x32xf32, #tpu.memory_space<vmem>>, vector<1x32xf32>
    %16 = vector.broadcast %15 : vector<1x32xf32> to vector<16x32xf32>
    %17 = arith.addf %14, %16 : vector<16x32xf32>
    %c0_19 = arith.constant 0 : index
    %c0_20 = arith.constant 0 : index
    %18 = vector.load %arg10[%c0_19, %c0_20] : memref<16x32xf32, #tpu.memory_space<vmem>>, vector<16x32xf32>
    tpu.vector_store %arg10[%c0_19, %c0_20], %17 {strides = array<i32>} : memref<16x32xf32, #tpu.memory_space<vmem>>, vector<16x32xf32>,
    return
  }
  func.func @transform_0(%arg0: i32) -> (i32, i32) {
    %c0_i32 = arith.constant 0 : i32
    %c0_i32_0 = arith.constant 0 : i32
    return %arg0, %c0_i32 : i32, i32
  }
  func.func @transform_1(%arg0: i32) -> (i32, i32) {
    %c0_i32 = arith.constant 0 : i32
    %c0_i32_0 = arith.constant 0 : i32
    %c0_i32_1 = arith.constant 0 : i32
    return %c0_i32, %c0_i32_0 : i32, i32
  }
  func.func @transform_2(%arg0: i32) -> (i32, i32) {
    %c0_i32 = arith.constant 0 : i32
    %c0_i32_0 = arith.constant 0 : i32
    %c0_i32_1 = arith.constant 0 : i32
    return %c0_i32, %c0_i32_0 : i32, i32
  }
  func.func @transform_3(%arg0: i32) -> (i32, i32) {
    %c0_i32 = arith.constant 0 : i32
    %c0_i32_0 = arith.constant 0 : i32
    %c0_i32_1 = arith.constant 0 : i32
    return %c0_i32, %c0_i32_0 : i32, i32
  }
  func.func @transform_4(%arg0: i32) -> (i32, i32) {
    %c0_i32 = arith.constant 0 : i32
    %c0_i32_0 = arith.constant 0 : i32
    %c0_i32_1 = arith.constant 0 : i32
    return %c0_i32, %c0_i32_0 : i32, i32
  }
  func.func @transform_5(%arg0: i32) -> (i32, i32) {
    %c0_i32 = arith.constant 0 : i32
    %c0_i32_0 = arith.constant 0 : i32
    %c0_i32_1 = arith.constant 0 : i32
    return %c0_i32, %c0_i32_0 : i32, i32
  }
  func.func @transform_6(%arg0: i32) -> (i32, i32) {
    %c0_i32 = arith.constant 0 : i32
    %c0_i32_0 = arith.constant 0 : i32
    %c0_i32_1 = arith.constant 0 : i32
    return %c0_i32, %c0_i32_0 : i32, i32
  }
  func.func @transform_7(%arg0: i32) -> (i32, i32) {
    %c0_i32 = arith.constant 0 : i32
    %c0_i32_0 = arith.constant 0 : i32
    return %arg0, %c0_i32 : i32, i32
  }
  func.func @transform_8(%arg0: i32) -> (i32, i32) {
    %c0_i32 = arith.constant 0 : i32
    %c0_i32_0 = arith.constant 0 : i32
    return %arg0, %c0_i32 : i32, i32
  }
  func.func @transform_9(%arg0: i32) -> (i32, i32) {
    %c0_i32 = arith.constant 0 : i32
    %c0_i32_0 = arith.constant 0 : i32
    return %arg0, %c0_i32 : i32, i32
  }
}

</mosaic_0001>

<llo_original>
// kernel: tpu_custom_call.1
$region0: #{tpu_custom_call.1}
  #allocation0 [shape = 'u32[]', space=smem, size = 0x4, offset = 0x4, fixed_abs, tag = 'smem constant byte address 0x4 - core index']
  #allocation1 [shape = 'u32[144,128]{1,0:T(1,128)}', space=vmem, size = 0x12000, scoped, tag = 'internal scratch']
  %s0 = inlined_call_operand.hbm [shape: f32[16,32], index: 0, kind: input, shape index: {}]
  %s1 = inlined_call_operand.hbm [shape: f32[32,32], index: 1, kind: input, shape index: {}]
  %s2 = inlined_call_operand.hbm [shape: f32[32,32], index: 2, kind: input, shape index: {}]
  %s3 = inlined_call_operand.hbm [shape: f32[32,32], index: 3, kind: input, shape index: {}]
  %s4 = inlined_call_operand.vmem [shape: f32[1,32], index: 4, kind: input, shape index: {}]
  %s5 = inlined_call_operand.vmem [shape: f32[1,32], index: 5, kind: input, shape index: {}]
  %s6 = inlined_call_operand.vmem [shape: f32[1,32], index: 6, kind: input, shape index: {}]
  %s7 = inlined_call_operand.hbm [shape: f32[16,32], index: 7, kind: output, shape index: {0}]
  %s8 = inlined_call_operand.hbm [shape: f32[16,32], index: 8, kind: output, shape index: {1}]
  %s9 = inlined_call_operand.hbm [shape: f32[16,32], index: 9, kind: output, shape index: {2}]
  %10 = xla_tuple %s7, %s8, %s9
  %s11 = sld [smem:[#allocation0]]
  $region70: #{tpu_custom_call.1} parent=0
    _
  %s13 = ssub.s32 1, %s11
  %s14 = scalar_select 0, %s13, %s11
  $region1: #{tpu_custom_call.1} parent=0
    #allocation2 [shape = 'u8[8192]{0}', space=vmem, size = 0x2000, scoped, tag = 'input window, operand 0, single buffered']
    #allocation3 [shape = 's32[1]{0}', space=sflag, size = 0x4, scoped, tag = 'scoped memory for tpu_custom_call.1']
    #allocation4 [shape = 's32[1]{0}', space=sflag, size = 0x4, scoped, tag = 'scoped memory for tpu_custom_call.1']
    #allocation5 [shape = 'u8[16384]{0}', space=vmem, size = 0x4000, scoped, tag = 'input window, operand 1, single buffered']
    #allocation6 [shape = 's32[1]{0}', space=sflag, size = 0x4, scoped, tag = 'scoped memory for tpu_custom_call.1']
    #allocation7 [shape = 'u8[16384]{0}', space=vmem, size = 0x4000, scoped, tag = 'input window, operand 2, single buffered']
    #allocation8 [shape = 'u8[16384]{0}', space=vmem, size = 0x4000, scoped, tag = 'input window, operand 3, single buffered']
    #allocation9 [shape = 's32[1]{0}', space=sflag, size = 0x4, scoped, tag = 'scoped memory for tpu_custom_call.1']
    #allocation10 [shape = 'u8[8192]{0}', space=vmem, size = 0x2000, scoped, tag = 'output window, operand 0, single buffered']
    #allocation11 [shape = 'u8[8192]{0}', space=vmem, size = 0x2000, scoped, tag = 'output window, operand 1, single buffered']
    #allocation12 [shape = 's32[1]{0}', space=sflag, size = 0x4, scoped, tag = 'scoped memory for tpu_custom_call.1']
    #allocation13 [shape = 'u8[8192]{0}', space=vmem, size = 0x2000, scoped, tag = 'output window, operand 2, single buffered']
    %15 = vsyncpa [#allocation3], 0
    %16 = vsyncpa [#allocation6], 0
    %17 = vsyncpa [#allocation9], 0
    %18 = vsyncpa [#allocation4], 0
    %19 = vsyncpa [#allocation12], 0
    // Predicated region
    $region2: #{tpu_custom_call.1} parent=1 // pred_check
      _
    $region3: #{tpu_custom_call.1} parent=1 // pred_check_branch
      %21 = sbr.rel (0) target = $region5
    $region4: #{tpu_custom_call.1} parent=1 // pred_region
      %s23 = ssub.s32 256, 256
      %24 = vsyncadd [#allocation3], %s23
      %s25 = sshll.u32 [#allocation2], 4
      %s26 = int_to_ptr.vmem [resolvable:$true] %s25
      %31 = dma.hbm_to_vmem [thread:$0]  %s0, 256, %s26, [#allocation3], 128, 128, 8
    $region5: #{tpu_custom_call.1} parent=1 // pred_fallthru
      _
    // Predicated region
    $region6: #{tpu_custom_call.1} parent=1 // pred_check
      _
    $region7: #{tpu_custom_call.1} parent=1 // pred_check_branch
      %33 = sbr.rel (0) target = $region9
    $region8: #{tpu_custom_call.1} parent=1 // pred_region
      %s35 = ssub.s32 512, 512
      %36 = vsyncadd [#allocation6], %s35
      %s37 = sshll.u32 [#allocation5], 4
      %s38 = int_to_ptr.vmem [resolvable:$true] %s37
      %43 = dma.hbm_to_vmem [thread:$0]  %s1, 512, %s38, [#allocation6], 128, 128, 8
    $region9: #{tpu_custom_call.1} parent=1 // pred_fallthru
      _
    // Predicated region
    $region10: #{tpu_custom_call.1} parent=1 // pred_check
      _
    $region11: #{tpu_custom_call.1} parent=1 // pred_check_branch
      %45 = sbr.rel (0) target = $region13
    $region12: #{tpu_custom_call.1} parent=1 // pred_region
      %s47 = ssub.s32 512, 512
      %48 = vsyncadd [#allocation6], %s47
      %s49 = sshll.u32 [#allocation7], 4
      %s50 = int_to_ptr.vmem [resolvable:$true] %s49
      %55 = dma.hbm_to_vmem [thread:$0]  %s2, 512, %s50, [#allocation6], 128, 128, 8
    $region13: #{tpu_custom_call.1} parent=1 // pred_fallthru
      _
    // Predicated region
    $region14: #{tpu_custom_call.1} parent=1 // pred_check
      _
    $region15: #{tpu_custom_call.1} parent=1 // pred_check_branch
      %57 = sbr.rel (0) target = $region17
    $region16: #{tpu_custom_call.1} parent=1 // pred_region
      %s59 = ssub.s32 512, 512
      %60 = vsyncadd [#allocation9], %s59
      %s61 = sshll.u32 [#allocation8], 4
      %s62 = int_to_ptr.vmem [resolvable:$true] %s61
      %67 = dma.hbm_to_vmem [thread:$0]  %s3, 512, %s62, [#allocation9], 128, 128, 8
    $region17: #{tpu_custom_call.1} parent=1 // pred_fallthru
      _
    // Predicated region
    $region18: #{tpu_custom_call.1} parent=1 // pred_check
      _
    $region19: #{tpu_custom_call.1} parent=1 // pred_check_branch
      %69 = sbr.rel (0) target = $region21
    $region20: #{tpu_custom_call.1} parent=1 // pred_region
      _
    $region21: #{tpu_custom_call.1} parent=1 // pred_fallthru
      _
    // Predicated region
    $region22: #{tpu_custom_call.1} parent=1 // pred_check
      _
    $region23: #{tpu_custom_call.1} parent=1 // pred_check_branch
      %71 = sbr.rel (0) target = $region25
    $region24: #{tpu_custom_call.1} parent=1 // pred_region
      _
    $region25: #{tpu_custom_call.1} parent=1 // pred_fallthru
      _
    // Predicated region
    $region26: #{tpu_custom_call.1} parent=1 // pred_check
      _
    $region27: #{tpu_custom_call.1} parent=1 // pred_check_branch
      %73 = sbr.rel (0) target = $region29
    $region28: #{tpu_custom_call.1} parent=1 // pred_region
      _
    $region29: #{tpu_custom_call.1} parent=1 // pred_fallthru
      _
    // Predicated region
    $region30: #{tpu_custom_call.1} parent=1 // pred_check
      _
    $region31: #{tpu_custom_call.1} parent=1 // pred_check_branch
      %75 = sbr.rel (0) target = $region33
    $region32: #{tpu_custom_call.1} parent=1 // pred_region
      %76 = dma.done [#allocation3], 256
    $region33: #{tpu_custom_call.1} parent=1 // pred_fallthru
      _
    // Predicated region
    $region34: #{tpu_custom_call.1} parent=1 // pred_check
      _
    $region35: #{tpu_custom_call.1} parent=1 // pred_check_branch
      %78 = sbr.rel (0) target = $region37
    $region36: #{tpu_custom_call.1} parent=1 // pred_region
      %79 = dma.done [#allocation6], 512
    $region37: #{tpu_custom_call.1} parent=1 // pred_fallthru
      _
    // Predicated region
    $region38: #{tpu_custom_call.1} parent=1 // pred_check
      _
    $region39: #{tpu_custom_call.1} parent=1 // pred_check_branch
      %81 = sbr.rel (0) target = $region41
    $region40: #{tpu_custom_call.1} parent=1 // pred_region
      %82 = dma.done [#allocation6], 512
    $region41: #{tpu_custom_call.1} parent=1 // pred_fallthru
      _
    // Predicated region
    $region42: #{tpu_custom_call.1} parent=1 // pred_check
      _
    $region43: #{tpu_custom_call.1} parent=1 // pred_check_branch
      %84 = sbr.rel (0) target = $region45
    $region44: #{tpu_custom_call.1} parent=1 // pred_region
      %85 = dma.done [#allocation9], 512
    $region45: #{tpu_custom_call.1} parent=1 // pred_fallthru
      _
    %v86 = vld [vmem:[#allocation2] sm:$0xff]
    %v87 = vld [vmem:[#allocation2 + $0x8] sm:$0xff]
    %v88 = vld [vmem:[#allocation5] sm:$0xff]
    %v89 = vld [vmem:[#allocation5 + $0x8] sm:$0xff]
    %v90 = vld [vmem:[#allocation5 + $0x10] sm:$0xff]
    %v91 = vld [vmem:[#allocation5 + $0x18] sm:$0xff]
    %v92 = vld [vmem:[%s4] sm:$0x1]
    %v94 = vlaneseq
    %v95 = vshrl.u32 %v94, 7
    %v96 = vsub.s32 0, %v95
    %v97 = vrot.slane %v92, %v96
    %vm99 = vcmask 261120
    %v101 = vsel %vm99, %v86, 0
    %v104 = vsel %vm99, %v87, 0
    %106 = vmatprep.subr.mxu0 0.0
    %107 = vmatpush1.msra.mxu0 %v88
    %108 = vmatprep.subr.mxu0 0.0
    %109 = vmatpush1.msra.mxu0 %v89
    %110 = vmatprep.subr.mxu0 0.0
    %111 = vmatpush1.msra.mxu0 %v90
    %112 = vmatprep.subr.mxu0 0.0
    %113 = vmatpush1.msra.mxu0 %v91
    %114 = vmatprep.subr.mxu0 0.0
    %115 = vmatpush1.msra.mxu0 0.0
    %116 = vmatprep.subr.mxu0 0.0
    %117 = vmatpush1.msra.mxu0 0.0
    %118 = vmatprep.subr.mxu0 0.0
    %119 = vmatpush1.msra.mxu0 0.0
    %120 = vmatprep.subr.mxu0 0.0
    %121 = vmatpush1.msra.mxu0 0.0
    %122 = vmatprep.subr.mxu0 0.0
    %123 = vmatpush1.msra.mxu0 0.0
    %124 = vmatprep.subr.mxu0 0.0
    %125 = vmatpush1.msra.mxu0 0.0
    %126 = vmatprep.subr.mxu0 0.0
    %127 = vmatpush1.msra.mxu0 0.0
    %128 = vmatprep.subr.mxu0 0.0
    %129 = vmatpush1.msra.mxu0 0.0
    %130 = vmatprep.subr.mxu0 0.0
    %131 = vmatpush1.msra.mxu0 0.0
    %132 = vmatprep.subr.mxu0 0.0
    %133 = vmatpush1.msra.mxu0 0.0
    %134 = vmatprep.subr.mxu0 0.0
    %135 = vmatpush1.msra.mxu0 0.0
    %136 = vmatprep.subr.mxu0 0.0
    %137 = vmatpush1.msra.mxu0 0.0
    %138 = vmatprep.subr.mxu0 0.0
    %139 = vmatpush1.msra.mxu0 0.0
    %140 = vmatprep.subr.mxu0 0.0
    %141 = vmatpush1.msra.mxu0 0.0
    %142 = vmatprep.subr.mxu0 0.0
    %143 = vmatpush1.msra.mxu0 0.0
    %144 = vmatprep.subr.mxu0 0.0
    %145 = vmatpush1.msra.mxu0 0.0
    %146 = vmatprep.subr.mxu0 0.0
    %147 = vmatpush1.msra.mxu0 0.0
    %148 = vmatprep.subr.mxu0 0.0
    %149 = vmatpush1.msra.mxu0 0.0
    %150 = vmatprep.subr.mxu0 0.0
    %151 = vmatpush1.msra.mxu0 0.0
    %152 = vmatprep.subr.mxu0 0.0
    %153 = vmatpush1.msra.mxu0 0.0
    %154 = vmatprep.subr.mxu0 0.0
    %155 = vmatpush1.msra.mxu0 0.0
    %156 = vmatprep.subr.mxu0 0.0
    %157 = vmatpush1.msra.mxu0 0.0
    %158 = vmatprep.subr.mxu0 0.0
    %159 = vmatpush1.msra.mxu0 0.0
    %160 = vmatprep.subr.mxu0 0.0
    %161 = vmatpush1.msra.mxu0 0.0
    %162 = vmatprep.subr.mxu0 0.0
    %163 = vmatpush1.msra.mxu0 0.0
    %164 = vmatprep.subr.mxu0 0.0
    %165 = vmatpush1.msra.mxu0 0.0
    %166 = vmatprep.subr.mxu0 0.0
    %167 = vmatpush1.msra.mxu0 0.0
    %168 = vmatprep.subr.mxu0 0.0
    %169 = vmatpush1.msra.mxu0 0.0
    %170 = vmatprep.mubr.f32.mxu0 0.0
    %171 = vmatmul.mubr.f32.gmra.mrb[0].mxu0 %v101
    %v172 = vpop.f32.mrb[0].mxu0
    %v173 = vadd.f32 %v97, %v172
    %v174 = vpop.f32.mrb[0].mxu0
    %175 = vmatprep.mubr.f32.mxu0 0.0
    %176 = vmatmul.mubr.f32.gmra.mrb[0].mxu0 %v104
    %v177 = vpop.f32.mrb[0].mxu0
    %v178 = vadd.f32 %v97, %v177
    %v179 = vpop.f32.mrb[0].mxu0
    %180 = vdwg.mxu0
    %181 = vst.msk [vmem:[#allocation10] sm:$0xff] %vm99, %v173
    %182 = vst.msk [vmem:[#allocation10 + $0x8] sm:$0xff] %vm99, %v178
    %v183 = vld [vmem:[#allocation7] sm:$0xff]
    %v184 = vld [vmem:[#allocation7 + $0x8] sm:$0xff]
    %v185 = vld [vmem:[#allocation7 + $0x10] sm:$0xff]
    %v186 = vld [vmem:[#allocation7 + $0x18] sm:$0xff]
    %v187 = vld [vmem:[%s5] sm:$0x1]
    %v189 = vlaneseq
    %v190 = vshrl.u32 %v189, 7
    %v191 = vsub.s32 0, %v190
    %v192 = vrot.slane %v187, %v191
    %194 = vmatprep.subr.mxu0 0.0
    %195 = vmatpush1.msra.mxu0 %v183
    %196 = vmatprep.subr.mxu0 0.0
    %197 = vmatpush1.msra.mxu0 %v184
    %198 = vmatprep.subr.mxu0 0.0
    %199 = vmatpush1.msra.mxu0 %v185
    %200 = vmatprep.subr.mxu0 0.0
    %201 = vmatpush1.msra.mxu0 %v186
    %202 = vmatprep.subr.mxu0 0.0
    %203 = vmatpush1.msra.mxu0 0.0
    %204 = vmatprep.subr.mxu0 0.0
    %205 = vmatpush1.msra.mxu0 0.0
    %206 = vmatprep.subr.mxu0 0.0
    %207 = vmatpush1.msra.mxu0 0.0
    %208 = vmatprep.subr.mxu0 0.0
    %209 = vmatpush1.msra.mxu0 0.0
    %210 = vmatprep.subr.mxu0 0.0
    %211 = vmatpush1.msra.mxu0 0.0
    %212 = vmatprep.subr.mxu0 0.0
    %213 = vmatpush1.msra.mxu0 0.0
    %214 = vmatprep.subr.mxu0 0.0
    %215 = vmatpush1.msra.mxu0 0.0
    %216 = vmatprep.subr.mxu0 0.0
    %217 = vmatpush1.msra.mxu0 0.0
    %218 = vmatprep.subr.mxu0 0.0
    %219 = vmatpush1.msra.mxu0 0.0
    %220 = vmatprep.subr.mxu0 0.0
    %221 = vmatpush1.msra.mxu0 0.0
    %222 = vmatprep.subr.mxu0 0.0
    %223 = vmatpush1.msra.mxu0 0.0
    %224 = vmatprep.subr.mxu0 0.0
    %225 = vmatpush1.msra.mxu0 0.0
    %226 = vmatprep.subr.mxu0 0.0
    %227 = vmatpush1.msra.mxu0 0.0
    %228 = vmatprep.subr.mxu0 0.0
    %229 = vmatpush1.msra.mxu0 0.0
    %230 = vmatprep.subr.mxu0 0.0
    %231 = vmatpush1.msra.mxu0 0.0
    %232 = vmatprep.subr.mxu0 0.0
    %233 = vmatpush1.msra.mxu0 0.0
    %234 = vmatprep.subr.mxu0 0.0
    %235 = vmatpush1.msra.mxu0 0.0
    %236 = vmatprep.subr.mxu0 0.0
    %237 = vmatpush1.msra.mxu0 0.0
    %238 = vmatprep.subr.mxu0 0.0
    %239 = vmatpush1.msra.mxu0 0.0
    %240 = vmatprep.subr.mxu0 0.0
    %241 = vmatpush1.msra.mxu0 0.0
    %242 = vmatprep.subr.mxu0 0.0
    %243 = vmatpush1.msra.mxu0 0.0
    %244 = vmatprep.subr.mxu0 0.0
    %245 = vmatpush1.msra.mxu0 0.0
    %246 = vmatprep.subr.mxu0 0.0
    %247 = vmatpush1.msra.mxu0 0.0
    %248 = vmatprep.subr.mxu0 0.0
    %249 = vmatpush1.msra.mxu0 0.0
    %250 = vmatprep.subr.mxu0 0.0
    %251 = vmatpush1.msra.mxu0 0.0
    %252 = vmatprep.subr.mxu0 0.0
    %253 = vmatpush1.msra.mxu0 0.0
    %254 = vmatprep.subr.mxu0 0.0
    %255 = vmatpush1.msra.mxu0 0.0
    %256 = vmatprep.subr.mxu0 0.0
    %257 = vmatpush1.msra.mxu0 0.0
    %258 = vmatprep.mubr.f32.mxu0 0.0
    %259 = vmatmul.mubr.f32.gmra.mrb[0].mxu0 %v101
    %v260 = vpop.f32.mrb[0].mxu0
    %v261 = vadd.f32 %v192, %v260
    %v262 = vpop.f32.mrb[0].mxu0
    %263 = vmatprep.mubr.f32.mxu0 0.0
    %264 = vmatmul.mubr.f32.gmra.mrb[0].mxu0 %v104
    %v265 = vpop.f32.mrb[0].mxu0
    %v266 = vadd.f32 %v192, %v265
    %v267 = vpop.f32.mrb[0].mxu0
    %268 = vdwg.mxu0
    %269 = vst.msk [vmem:[#allocation11] sm:$0xff] %vm99, %v261
    %270 = vst.msk [vmem:[#allocation11 + $0x8] sm:$0xff] %vm99, %v266
    %v271 = vld [vmem:[#allocation8] sm:$0xff]
    %v272 = vld [vmem:[#allocation8 + $0x8] sm:$0xff]
    %v273 = vld [vmem:[#allocation8 + $0x10] sm:$0xff]
    %v274 = vld [vmem:[#allocation8 + $0x18] sm:$0xff]
    %v275 = vld [vmem:[%s6] sm:$0x1]
    %v277 = vlaneseq
    %v278 = vshrl.u32 %v277, 7
    %v279 = vsub.s32 0, %v278
    %v280 = vrot.slane %v275, %v279
    %282 = vmatprep.subr.mxu0 0.0
    %283 = vmatpush1.msra.mxu0 %v271
    %284 = vmatprep.subr.mxu0 0.0
    %285 = vmatpush1.msra.mxu0 %v272
    %286 = vmatprep.subr.mxu0 0.0
    %287 = vmatpush1.msra.mxu0 %v273
    %288 = vmatprep.subr.mxu0 0.0
    %289 = vmatpush1.msra.mxu0 %v274
    %290 = vmatprep.subr.mxu0 0.0
    %291 = vmatpush1.msra.mxu0 0.0
    %292 = vmatprep.subr.mxu0 0.0
    %293 = vmatpush1.msra.mxu0 0.0
    %294 = vmatprep.subr.mxu0 0.0
    %295 = vmatpush1.msra.mxu0 0.0
    %296 = vmatprep.subr.mxu0 0.0
    %297 = vmatpush1.msra.mxu0 0.0
    %298 = vmatprep.subr.mxu0 0.0
    %299 = vmatpush1.msra.mxu0 0.0
    %300 = vmatprep.subr.mxu0 0.0
    %301 = vmatpush1.msra.mxu0 0.0
    %302 = vmatprep.subr.mxu0 0.0
    %303 = vmatpush1.msra.mxu0 0.0
    %304 = vmatprep.subr.mxu0 0.0
    %305 = vmatpush1.msra.mxu0 0.0
    %306 = vmatprep.subr.mxu0 0.0
    %307 = vmatpush1.msra.mxu0 0.0
    %308 = vmatprep.subr.mxu0 0.0
    %309 = vmatpush1.msra.mxu0 0.0
    %310 = vmatprep.subr.mxu0 0.0
    %311 = vmatpush1.msra.mxu0 0.0
    %312 = vmatprep.subr.mxu0 0.0
    %313 = vmatpush1.msra.mxu0 0.0
    %314 = vmatprep.subr.mxu0 0.0
    %315 = vmatpush1.msra.mxu0 0.0
    %316 = vmatprep.subr.mxu0 0.0
    %317 = vmatpush1.msra.mxu0 0.0
    %318 = vmatprep.subr.mxu0 0.0
    %319 = vmatpush1.msra.mxu0 0.0
    %320 = vmatprep.subr.mxu0 0.0
    %321 = vmatpush1.msra.mxu0 0.0
    %322 = vmatprep.subr.mxu0 0.0
    %323 = vmatpush1.msra.mxu0 0.0
    %324 = vmatprep.subr.mxu0 0.0
    %325 = vmatpush1.msra.mxu0 0.0
    %326 = vmatprep.subr.mxu0 0.0
    %327 = vmatpush1.msra.mxu0 0.0
    %328 = vmatprep.subr.mxu0 0.0
    %329 = vmatpush1.msra.mxu0 0.0
    %330 = vmatprep.subr.mxu0 0.0
    %331 = vmatpush1.msra.mxu0 0.0
    %332 = vmatprep.subr.mxu0 0.0
    %333 = vmatpush1.msra.mxu0 0.0
    %334 = vmatprep.subr.mxu0 0.0
    %335 = vmatpush1.msra.mxu0 0.0
    %336 = vmatprep.subr.mxu0 0.0
    %337 = vmatpush1.msra.mxu0 0.0
    %338 = vmatprep.subr.mxu0 0.0
    %339 = vmatpush1.msra.mxu0 0.0
    %340 = vmatprep.subr.mxu0 0.0
    %341 = vmatpush1.msra.mxu0 0.0
    %342 = vmatprep.subr.mxu0 0.0
    %343 = vmatpush1.msra.mxu0 0.0
    %344 = vmatprep.subr.mxu0 0.0
    %345 = vmatpush1.msra.mxu0 0.0
    %346 = vmatprep.mubr.f32.mxu0 0.0
    %347 = vmatmul.mubr.f32.gmra.mrb[0].mxu0 %v101
    %v348 = vpop.f32.mrb[0].mxu0
    %v349 = vadd.f32 %v280, %v348
    %v350 = vpop.f32.mrb[0].mxu0
    %351 = vmatprep.mubr.f32.mxu0 0.0
    %352 = vmatmul.mubr.f32.gmra.mrb[0].mxu0 %v104
    %v353 = vpop.f32.mrb[0].mxu0
    %v354 = vadd.f32 %v280, %v353
    %v355 = vpop.f32.mrb[0].mxu0
    %356 = vdwg.mxu0
    %357 = vst.msk [vmem:[#allocation13] sm:$0xff] %vm99, %v349
    %358 = vst.msk [vmem:[#allocation13 + $0x8] sm:$0xff] %vm99, %v354
    // Predicated region
    $region46: #{tpu_custom_call.1} parent=1 // pred_check
      _
    $region47: #{tpu_custom_call.1} parent=1 // pred_check_branch
      %360 = sbr.rel (0) target = $region49
    $region48: #{tpu_custom_call.1} parent=1 // pred_region
      %s362 = ssub.s32 256, 256
      %363 = vsyncadd [#allocation4], %s362
      %s364 = sshll.u32 [#allocation10], 4
      %s365 = int_to_ptr.vmem [resolvable:$true] %s364
      %370 = dma.vmem_to_hbm [thread:$0]  %s365, 256, %s7, [#allocation4], 128, 128, 8
    $region49: #{tpu_custom_call.1} parent=1 // pred_fallthru
      _
    // Predicated region
    $region50: #{tpu_custom_call.1} parent=1 // pred_check
      _
    $region51: #{tpu_custom_call.1} parent=1 // pred_check_branch
      %372 = sbr.rel (0) target = $region53
    $region52: #{tpu_custom_call.1} parent=1 // pred_region
      %s374 = ssub.s32 256, 256
      %375 = vsyncadd [#allocation12], %s374
      %s376 = sshll.u32 [#allocation11], 4
      %s377 = int_to_ptr.vmem [resolvable:$true] %s376
      %382 = dma.vmem_to_hbm [thread:$0]  %s377, 256, %s8, [#allocation12], 128, 128, 8
    $region53: #{tpu_custom_call.1} parent=1 // pred_fallthru
      _
    // Predicated region
    $region54: #{tpu_custom_call.1} parent=1 // pred_check
      _
    $region55: #{tpu_custom_call.1} parent=1 // pred_check_branch
      %384 = sbr.rel (0) target = $region57
    $region56: #{tpu_custom_call.1} parent=1 // pred_region
      %s386 = ssub.s32 256, 256
      %387 = vsyncadd [#allocation12], %s386
      %s388 = sshll.u32 [#allocation13], 4
      %s389 = int_to_ptr.vmem [resolvable:$true] %s388
      %394 = dma.vmem_to_hbm [thread:$0]  %s389, 256, %s9, [#allocation12], 128, 128, 8
    $region57: #{tpu_custom_call.1} parent=1 // pred_fallthru
      _
    // Predicated region
    $region58: #{tpu_custom_call.1} parent=1 // pred_check
      _
    $region59: #{tpu_custom_call.1} parent=1 // pred_check_branch
      %396 = sbr.rel (0) target = $region61
    $region60: #{tpu_custom_call.1} parent=1 // pred_region
      %397 = dma.done [#allocation4], 256
    $region61: #{tpu_custom_call.1} parent=1 // pred_fallthru
      _
    // Predicated region
    $region62: #{tpu_custom_call.1} parent=1 // pred_check
      _
    $region63: #{tpu_custom_call.1} parent=1 // pred_check_branch
      %399 = sbr.rel (0) target = $region65
    $region64: #{tpu_custom_call.1} parent=1 // pred_region
      %400 = dma.done [#allocation12], 256
    $region65: #{tpu_custom_call.1} parent=1 // pred_fallthru
      _
    // Predicated region
    $region66: #{tpu_custom_call.1} parent=1 // pred_check
      _
    $region67: #{tpu_custom_call.1} parent=1 // pred_check_branch
      %402 = sbr.rel (0) target = $region69
    $region68: #{tpu_custom_call.1} parent=1 // pred_region
      %403 = dma.done [#allocation12], 256
    $region69: #{tpu_custom_call.1} parent=1 // pred_fallthru
      _
    %404 = vsyncpa [#allocation3], 1
    %405 = vsyncpa [#allocation6], 1
    %406 = vsyncpa [#allocation9], 1
    %407 = vsyncpa [#allocation4], 1
    %408 = vsyncpa [#allocation12], 1

</llo_original>
